<compile_context>
chip_gen: v6e
topology: v6e:2x2x1
jax: 0.10.0
libtpu: 0.0.40
codegen_flags: <defaults>
</compile_context>

<pallas_src>
import functools
import math

import jax
import jax.numpy as jnp
from jax.experimental import pallas as pl
from jax.experimental.pallas import tpu as pltpu

BN_EPS = 1e-5


# ----------------------------- small helpers ---------------------------------

def _round_up(v, m):
    return ((v + m - 1) // m) * m


@functools.lru_cache(maxsize=None)
def _vmem_capacity_bytes():
    """Per-core VMEM capacity; conservative 64 MiB (v7x) if the query fails."""
    try:
        cap = getattr(pltpu.get_tpu_info(), "vmem_capacity_bytes", None)
        if cap:
            return int(cap)
    except Exception:
        pass
    return 64 * 1024 * 1024


def _clamp_vmem(need_bytes):
    """vmem_limit_bytes: footprint + headroom, capped at 85% of physical VMEM."""
    hi = int(0.85 * _vmem_capacity_bytes())
    return int(max(min(need_bytes + (8 << 20), hi), min(32 << 20, hi)))


def _block_bytes(blocks):
    """Double-buffered VMEM bytes for a list of ((rows, cols), dtype) blocks."""
    total = 0
    for shape, dtype in blocks:
        r = _round_up(shape[-2], 8)
        c = _round_up(shape[-1], 128)
        total += 2 * r * c * jnp.dtype(dtype).itemsize
    return total


def _pick_tile(total, cap, quantum):
    """Largest multiple of `quantum` that divides `total` and is <= cap."""
    t = min(total, max((cap // quantum) * quantum, quantum))
    while total % t != 0:
        t -= quantum
    return t


def _fused_vmem_bytes(npad, dmax):
    act = npad * dmax * 2          # resident bf16 activation scratch
    w = 2 * dmax * dmax * 2        # double-buffered bf16 weight block
    p = 2 * 8 * dmax * 4           # double-buffered packed params (padded)
    out = npad * dmax * 4          # resident f32 output block
    tmp = 4 * npad * dmax * 4      # f32 intermediates inside the kernel body
    return act + w + p + out + tmp


# ----------------------------- fused whole-MLP kernel -------------------------

def _fused_mlp_kernel(n_ref, x_hbm, w_ref, p_ref, o_ref, act_ref,
                      *, batch_norm, n_layers):
    # n_ref:   (1,) int32 SMEM (prefetched)        -> number of valid batch rows
    # x_hbm:   (npad, Dmax) bf16 in HBM (pl.ANY)   -> staged once into act_ref
    # w_ref:   (1, Dmax, Dmax) bf16 (this layer)   -> streamed per grid step
    # p_ref:   (1, 3, Dmax) f32 [bias; gamma; beta]
    # o_ref:   (npad, Dmax) f32 resident output block
    # act_ref: (npad, Dmax) bf16 resident activation scratch
    layer = pl.program_id(0)

    @pl.when(layer == 0)
    def _():
        # Single staging copy: x is read exactly once for the whole network.
        pltpu.sync_copy(x_hbm, act_ref)

    # This layer's matmul: bf16 operands, f32 MXU accumulation.
    h = jnp.dot(act_ref[...], w_ref[0], preferred_element_type=jnp.float32)

    @pl.when(layer < n_layers - 1)
    def _hidden():
        if batch_norm:
            # Bias dropped: (h + b) - mean(h + b) == h - mean(h).
            n_valid = n_ref[0]
            rows = h.shape[0]
            row_id = jax.lax.broadcasted_iota(jnp.int32, (rows, 1), 0)
            valid = row_id < n_valid                     # mask padded batch rows
            inv_n = 1.0 / n_valid.astype(jnp.float32)
            hm = jnp.where(valid, h, 0.0)
            mean = jnp.sum(hm, axis=0, keepdims=True) * inv_n
            centered = jnp.where(valid, h - mean, 0.0)   # two-pass variance
            var = jnp.sum(centered * centered, axis=0, keepdims=True) * inv_n
            scale = p_ref[0, 1:2, :] * jax.lax.rsqrt(var + BN_EPS)
            z = centered * scale + p_ref[0, 2:3, :]
        else:
            z = h + p_ref[0, 0:1, :]
        act_ref[...] = jnp.maximum(z, 0.0).astype(act_ref.dtype)

    @pl.when(layer == n_layers - 1)
    def _final():
        o_ref[...] = (h + p_ref[0, 0:1, :]).astype(o_ref.dtype)


def _fused_forward(xp, w_stack, p_stack, n_arr, *, batch_norm, vmem_limit):
    n_layers, dmax, _ = w_stack.shape
    npad = xp.shape[0]
    kernel = functools.partial(_fused_mlp_kernel,
                               batch_norm=batch_norm, n_layers=n_layers)
    return pl.pallas_call(
        kernel,
        out_shape=jax.ShapeDtypeStruct((npad, dmax), jnp.float32),
        grid_spec=pltpu.PrefetchScalarGridSpec(
            num_scalar_prefetch=1,
            grid=(n_layers,),
            in_specs=[
                pl.BlockSpec(memory_space=pl.ANY),                    # x in HBM
                pl.BlockSpec((1, dmax, dmax), lambda l, n: (l, 0, 0)),
                pl.BlockSpec((1, 3, dmax), lambda l, n: (l, 0, 0)),
            ],
            out_specs=pl.BlockSpec((npad, dmax), lambda l, n: (0, 0)),
            scratch_shapes=[pltpu.VMEM((npad, dmax), jnp.bfloat16)]),
        compiler_params=pltpu.CompilerParams(
            dimension_semantics=("arbitrary",),
            vmem_limit_bytes=vmem_limit),
    )(n_arr, xp, w_stack, p_stack)


# ----------------------------- per-layer fallback kernels ---------------------

def _hidden_bn_kernel(n_ref, x_ref, w_ref, p_ref, o_ref):
    # x_ref: (npad, Din) bf16   w_ref: (Din, TF) bf16   p_ref: (2, TF) [gamma; beta]
    n_valid = n_ref[0]
    h = jnp.dot(x_ref[...], w_ref[...], preferred_element_type=jnp.float32)
    rows = h.shape[0]
    row_id = jax.lax.broadcasted_iota(jnp.int32, (rows, 1), 0)
    valid = row_id < n_valid
    inv_n = 1.0 / n_valid.astype(jnp.float32)
    hm = jnp.where(valid, h, 0.0)
    mean = jnp.sum(hm, axis=0, keepdims=True) * inv_n
    centered = jnp.where(valid, h - mean, 0.0)
    var = jnp.sum(centered * centered, axis=0, keepdims=True) * inv_n
    scale = p_ref[0:1, :] * jax.lax.rsqrt(var + BN_EPS)
    z = centered * scale + p_ref[1:2, :]
    o_ref[...] = jnp.maximum(z, 0.0).astype(o_ref.dtype)


def _linear_kernel(apply_relu, x_ref, w_ref, b_ref, o_ref):
    h = jnp.dot(x_ref[...], w_ref[...], preferred_element_type=jnp.float32)
    h = h + b_ref[0:1, :]
    if apply_relu:
        h = jnp.maximum(h, 0.0)
    o_ref[...] = h.astype(o_ref.dtype)


def _run_hidden_bn(h, w, p, n_arr):
    # BN needs full-batch stats: keep the batch resident, tile output features.
    npad, dinp = h.shape
    doutp = w.shape[1]
    big = _vmem_capacity_bytes() >= (100 << 20)
    tf = _pick_tile(doutp, 1024 if big else 512, 128)
    blocks = [((npad, dinp), h.dtype), ((dinp, tf), w.dtype),
              ((8, tf), p.dtype), ((npad, tf), jnp.bfloat16)]
    return pl.pallas_call(
        _hidden_bn_kernel,
        out_shape=jax.ShapeDtypeStruct((npad, doutp), jnp.bfloat16),
        grid_spec=pltpu.PrefetchScalarGridSpec(
            num_scalar_prefetch=1,
            grid=(doutp // tf,),
            in_specs=[pl.BlockSpec((npad, dinp), lambda j, n: (0, 0)),
                      pl.BlockSpec((dinp, tf), lambda j, n: (0, j)),
                      pl.BlockSpec((2, tf), lambda j, n: (0, j))],
            out_specs=pl.BlockSpec((npad, tf), lambda j, n: (0, j))),
        compiler_params=pltpu.CompilerParams(
            dimension_semantics=("parallel",),
            vmem_limit_bytes=_clamp_vmem(_block_bytes(blocks))),
    )(n_arr, h, w, p)


def _run_linear(h, w, b, *, apply_relu, out_dtype):
    npad, dinp = h.shape
    doutp = w.shape[1]
    big = _vmem_capacity_bytes() >= (100 << 20)
    tf = _pick_tile(doutp, 1024 if big else 512, 128)
    tb = _pick_tile(npad, 512 if big else 256, 16)
    blocks = [((tb, dinp), h.dtype), ((dinp, tf), w.dtype),
              ((8, tf), b.dtype), ((tb, tf), out_dtype)]
    # Feature axis OUTER, batch axis INNER: the (dinp, tf) weight block index is
    # constant along the inner axis, so the weight tile is not re-streamed from
    # HBM once per batch tile.
    return pl.pallas_call(
        functools.partial(_linear_kernel, apply_relu),
        out_shape=jax.ShapeDtypeStruct((npad, doutp), out_dtype),
        grid=(doutp // tf, npad // tb),
        in_specs=[pl.BlockSpec((tb, dinp), lambda f, bi: (bi, 0)),
                  pl.BlockSpec((dinp, tf), lambda f, bi: (0, f)),
                  pl.BlockSpec((1, tf), lambda f, bi: (0, f))],
        out_specs=pl.BlockSpec((tb, tf), lambda f, bi: (bi, f)),
        compiler_params=pltpu.CompilerParams(
            dimension_semantics=("parallel", "parallel"),
            vmem_limit_bytes=_clamp_vmem(_block_bytes(blocks))),
    )(h, w, b)


# ----------------------------- forward ----------------------------------------

def mlp_forward(x, packed, *, batch_norm, output_dim, max_fused_vmem_bytes=None):
    """x: (N, input_dim) float32. packed: output of prepare_params()."""
    n, d = x.shape
    w_stack, p_stack, dims = packed["w_stack"], packed["p_stack"], packed["dims"]
    n_layers, dmax, _ = w_stack.shape
    npad = _round_up(n, 16)
    n_arr = jnp.array([n], jnp.int32)

    budget = (int(0.8 * _vmem_capacity_bytes())
              if max_fused_vmem_bytes is None else max_fused_vmem_bytes)
    need = _fused_vmem_bytes(npad, dmax)

    if need <= budget:
        # Fused path: whole network in one pallas_call, activation stays in VMEM.
        xp = (jnp.zeros((npad, dmax), jnp.bfloat16)
              .at[:n, :d].set(x.astype(jnp.bfloat16)))
        out = _fused_forward(xp, w_stack, p_stack, n_arr,
                             batch_norm=batch_norm, vmem_limit=_clamp_vmem(need))
    else:
        # Per-layer fallback for working sets that do not fit in VMEM.
        # (A K-axis reduction grid for layers whose input width alone exceeds
        #  the VMEM budget is left to future work.)
        din0p = _round_up(dims[0][0], 128)
        h = (jnp.zeros((npad, din0p), jnp.bfloat16)
             .at[:n, :d].set(x.astype(jnp.bfloat16)))
        for li in range(n_layers - 1):
            dinp = _round_up(dims[li][0], 128)
            doutp = _round_up(dims[li][1], 128)
            w = w_stack[li, :dinp, :doutp]
            if batch_norm:
                h = _run_hidden_bn(h, w, p_stack[li, 1:3, :doutp], n_arr)
            else:
                h = _run_linear(h, w, p_stack[li, 0:1, :doutp],
                                apply_relu=True, out_dtype=jnp.bfloat16)
        dinp = _round_up(dims[-1][0], 128)
        doutp = _round_up(dims[-1][1], 128)
        out = _run_linear(h, w_stack[n_layers - 1, :dinp, :doutp],
                          p_stack[n_layers - 1, 0:1, :doutp],
                          apply_relu=False, out_dtype=jnp.float32)

    return out[:n, :output_dim]


# ----------------------------- params ------------------------------------------

def init_mlp_params(key, input_dim, hidden_dim, output_dim, num_layers, batch_norm):
    """Logical (unpadded, f32) params, PyTorch-style init. Weights stored (in, out)."""
    if num_layers < 1:
        raise ValueError("number of layers should be positive!")
    if num_layers == 1:
        dims = [(input_dim, output_dim)]
    else:
        dims = ([(input_dim, hidden_dim)]
                + [(hidden_dim, hidden_dim)] * (num_layers - 2)
                + [(hidden_dim, output_dim)])

    layers = []
    for li, (din, dout) in enumerate(dims):
        key, kw, kb = jax.random.split(key, 3)
        bound = 1.0 / math.sqrt(din)
        layer = {
            "w": jax.random.uniform(kw, (din, dout), jnp.float32, -bound, bound),
            "b": jax.random.uniform(kb, (dout,), jnp.float32, -bound, bound),
        }
        if li < num_layers - 1 and batch_norm:
            layer["gamma"] = jnp.ones((dout,), jnp.float32)
            layer["beta"] = jnp.zeros((dout,), jnp.float32)
        layers.append(layer)
    return layers


def prepare_params(layers, batch_norm):
    """Pad every layer to (Dmax, Dmax), stack weights (bf16) and params (f32).

    p_stack rows: [0]=bias, [1]=gamma, [2]=beta.  For BatchNorm hidden layers
    the bias is dropped entirely (absorbed by the BN mean subtraction)."""
    n_layers = len(layers)
    dims = [tuple(layer["w"].shape) for layer in layers]
    dmax = 128
    for din, dout in dims:
        dmax = max(dmax, _round_up(din, 128), _round_up(dout, 128))

    w_stack = jnp.zeros((n_layers, dmax, dmax), jnp.float32)
    p_stack = jnp.zeros((n_layers, 3, dmax), jnp.float32)
    for li, layer in enumerate(layers):
        din, dout = dims[li]
        w_stack = w_stack.at[li, :din, :dout].set(layer["w"])
        if li < n_layers - 1 and batch_norm:
            p_stack = p_stack.at[li, 1, :dout].set(layer["gamma"])
            p_stack = p_stack.at[li, 2, :dout].set(layer["beta"])
        else:
            p_stack = p_stack.at[li, 0, :dout].set(layer["b"])
    return {"w_stack": w_stack.astype(jnp.bfloat16),
            "p_stack": p_stack,
            "dims": dims}


# ----------------------------- reference -----------------------------------------

def mlp_reference(x, layers, *, batch_norm):
    """Pure-JAX reference mirroring kernel numerics (bf16 matmul operands, f32
    accumulation, train-mode BatchNorm with biased variance over the full batch)."""
    h = x.astype(jnp.bfloat16)
    n_layers = len(layers)
    for li, layer in enumerate(layers):
        w = layer["w"].astype(jnp.bfloat16)
        z = jnp.dot(h, w, preferred_element_type=jnp.float32) + layer["b"][None, :]
        if li == n_layers - 1:
            return z
        if batch_norm:
            mean = jnp.mean(z, axis=0, keepdims=True)
            var = jnp.mean((z - mean) ** 2, axis=0, keepdims=True)
            z = ((z - mean) * jax.lax.rsqrt(var + BN_EPS)
                 * layer["gamma"][None, :] + layer["beta"][None, :])
        h = jnp.maximum(z, 0.0).astype(jnp.bfloat16)


# ----------------------------- demo ----------------------------------------------

if __name__ == "__main__":
    configs = [
        # (batch, input_dim, hidden_dim, output_dim, num_layers, batch_norm, force_fallback)
        (8,   16,  32,  8, 3, True,  False),   # fused path, BN
        (50,  70, 600, 33, 4, True,  False),   # fused path, BN, padding + masked rows
        (288, 16,  32, 12, 2, False, False),   # fused path, no BN
        (12,  16,  32,  8, 1, True,  False),   # num_layers == 1 -> plain linear
        (64,  48, 256, 10, 3, True,  True),    # per-layer fallback, BN
        (96,  48, 256, 10, 3, False, True),    # per-layer fallback, no BN
    ]
    key = jax.random.PRNGKey(0)
    for (batch, input_dim, hidden_dim, output_dim, num_layers, bn, force_fb) in configs:
        key, kx, kp = jax.random.split(key, 3)
        x = jax.random.normal(kx, (batch, input_dim), jnp.float32)
        layers = init_mlp_params(kp, input_dim, hidden_dim, output_dim,
                                 num_layers, bn)
        packed = prepare_params(layers, bn)

        out = mlp_forward(x, packed, batch_norm=bn, output_dim=output_dim,
                          max_fused_vmem_bytes=(0 if force_fb else None))
        out = jax.block_until_ready(out)

        ref = mlp_reference(x, layers, batch_norm=bn)
        assert out.shape == (batch, output_dim)
        if not jnp.allclose(out, ref, atol=3e-3, rtol=3e-3):
            max_err = float(jnp.max(jnp.abs(out - ref)))
            raise AssertionError(f"mismatch vs reference (max abs err={max_err})")

    print("KERNEL_OK")
</pallas_src>

<mosaic_0001>
module attributes {stable_mosaic.version = 11 : i64} {
  func.func @_fused_mlp_kernel(%arg0: i32, %arg1: memref<1xi32, #tpu.memory_space<smem>>, %arg2: memref<16x128xbf16, #tpu.memory_space<any>>, %arg3: memref<1x128x128xbf16, #tpu.memory_space<vmem>>, %arg4: memref<1x3x128xf32, #tpu.memory_space<vmem>>, %arg5: memref<16x128xf32, #tpu.memory_space<vmem>>, %arg6: memref<16x128xbf16, #tpu.memory_space<vmem>>) attributes {dimension_semantics = [#tpu.dimension_semantics<arbitrary>], iteration_bounds = array<i64: 3>, scalar_prefetch = 1 : i64, scratch_operands = 1 : i64, tpu.core_type = #tpu.core_type<tc>, window_params = [{}, {transform_indices = @transform_1, window_bounds = array<i64: 1, 128, 128>}, {transform_indices = @transform_2, window_bounds = array<i64: 1, 3, 128>}, {pipeline_mode = #tpu.pipeline_mode<synchronous>, transform_indices = @transform_3, window_bounds = array<i64: 16, 128>}]} {
    %c0_i32 = arith.constant 0 : i32
    %0 = arith.cmpi eq, %arg0, %c0_i32 : i32
    %1 = arith.extui %0 : i1 to i32
    %c0_i32_0 = arith.constant 0 : i32
    %2 = arith.cmpi ne, %1, %c0_i32_0 : i32
    scf.if %2 {
      "tpu.region"() ({
        %13 = tpu.sem_alloc : memref<!tpu.dma_semaphore, #tpu.memory_space<semaphore_mem>>
        tpu.enqueue_dma source(%arg2 : memref<16x128xbf16, #tpu.memory_space<any>>) target(%arg6 : memref<16x128xbf16, #tpu.memory_space<vmem>>) target_semaphore(%13 : memref<!tpu.dma_semaphore, #tpu.memory_space<semaphore_mem>>)
        tpu.wait_dma2 semaphore(%13 : memref<!tpu.dma_semaphore, #tpu.memory_space<semaphore_mem>>) src(%arg2 : memref<16x128xbf16, #tpu.memory_space<any>>) dst(%arg6 : memref<16x128xbf16, #tpu.memory_space<vmem>>)
        tpu.yield
      }) : () -> ()
    } else {
    }
    %c0 = arith.constant 0 : index
    %c0_1 = arith.constant 0 : index
    %3 = vector.load %arg6[%c0, %c0_1] : memref<16x128xbf16, #tpu.memory_space<vmem>>, vector<16x128xbf16>
    %c0_2 = arith.constant 0 : index
    %c0_3 = arith.constant 0 : index
    %c0_4 = arith.constant 0 : index
    %4 = vector.load %arg3[%c0_2, %c0_3, %c0_4] : memref<1x128x128xbf16, #tpu.memory_space<vmem>>, vector<1x128x128xbf16>
    %5 = vector.shape_cast %4 : vector<1x128x128xbf16> to vector<128x128xbf16>
    %cst = arith.constant dense<0.000000e+00> : vector<16x128xf32>
    %6 = tpu.matmul %3, %5, %cst {dimension_numbers = #tpu.dot_dimension_numbers<[1], [0], [0], [1], [0, 0, 1, 1], [], []>} : vector<16x128xbf16>, vector<128x128xbf16>, vector<16x128xf32> -> vector<16x128xf32>
    %c2_i32 = arith.constant 2 : i32
    %7 = arith.cmpi slt, %arg0, %c2_i32 : i32
    %8 = arith.extui %7 : i1 to i32
    %c0_i32_5 = arith.constant 0 : i32
    %9 = arith.cmpi ne, %8, %c0_i32_5 : i32
    scf.if %9 {
      %c0_8 = arith.constant 0 : index
      %13 = memref.load %arg1[%c0_8] : memref<1xi32, #tpu.memory_space<smem>>
      %14 = tpu.iota {dimensions = array<i32: 0>} : vector<16x1xi32>
      %15 = vector.broadcast %13 : i32 to vector<16x1xi32>
      %16 = arith.cmpi slt, %14, %15 : vector<16x1xi32>
      %17 = arith.sitofp %13 : i32 to f32
      %cst_9 = arith.constant 1.000000e+00 : f32
      %18 = arith.divf %cst_9, %17 : f32
      %cst_10 = arith.constant 0.000000e+00 : f32
      %19 = vector.shape_cast %16 : vector<16x1xi1> to vector<16x1xi1>
      %20 = vector.broadcast %19 : vector<16x1xi1> to vector<16x128xi1>
      %21 = vector.broadcast %cst_10 : f32 to vector<16x128xf32>
      %22 = arith.select %20, %6, %21 : vector<16x128xi1>, vector<16x128xf32>
      %cst_11 = arith.constant dense<0.000000e+00> : vector<128xf32>
      %23 = vector.multi_reduction <add>, %22, %cst_11 [0] : vector<16x128xf32> to vector<128xf32>
      %24 = vector.shape_cast %23 : vector<128xf32> to vector<1x128xf32>
      %25 = vector.broadcast %18 : f32 to vector<1x128xf32>
      %26 = arith.mulf %24, %25 : vector<1x128xf32>
      %27 = vector.broadcast %26 : vector<1x128xf32> to vector<16x128xf32>
      %28 = arith.subf %6, %27 : vector<16x128xf32>
      %cst_12 = arith.constant 0.000000e+00 : f32
      %29 = vector.shape_cast %16 : vector<16x1xi1> to vector<16x1xi1>
      %30 = vector.broadcast %29 : vector<16x1xi1> to vector<16x128xi1>
      %31 = vector.broadcast %cst_12 : f32 to vector<16x128xf32>
      %32 = arith.select %30, %28, %31 : vector<16x128xi1>, vector<16x128xf32>
      %33 = arith.mulf %32, %32 : vector<16x128xf32>
      %cst_13 = arith.constant dense<0.000000e+00> : vector<128xf32>
      %34 = vector.multi_reduction <add>, %33, %cst_13 [0] : vector<16x128xf32> to vector<128xf32>
      %35 = vector.shape_cast %34 : vector<128xf32> to vector<1x128xf32>
      %36 = vector.broadcast %18 : f32 to vector<1x128xf32>
      %37 = arith.mulf %35, %36 : vector<1x128xf32>
      %c0_14 = arith.constant 0 : index
      %c1 = arith.constant 1 : index
      %c0_15 = arith.constant 0 : index
      %38 = vector.load %arg4[%c0_14, %c1, %c0_15] : memref<1x3x128xf32, #tpu.memory_space<vmem>>, vector<1x1x128xf32>
      %39 = vector.shape_cast %38 : vector<1x1x128xf32> to vector<1x128xf32>
      %cst_16 = arith.constant 9.99999974E-6 : f32
      %40 = vector.broadcast %cst_16 : f32 to vector<1x128xf32>
      %41 = arith.addf %37, %40 : vector<1x128xf32>
      %42 = math.rsqrt %41 : vector<1x128xf32>
      %43 = arith.mulf %39, %42 : vector<1x128xf32>
      %44 = vector.broadcast %43 : vector<1x128xf32> to vector<16x128xf32>
      %45 = arith.mulf %32, %44 : vector<16x128xf32>
      %c0_17 = arith.constant 0 : index
      %c2 = arith.constant 2 : index
      %c0_18 = arith.constant 0 : index
      %46 = vector.load %arg4[%c0_17, %c2, %c0_18] : memref<1x3x128xf32, #tpu.memory_space<vmem>>, vector<1x1x128xf32>
      %47 = vector.shape_cast %46 : vector<1x1x128xf32> to vector<1x128xf32>
      %48 = vector.broadcast %47 : vector<1x128xf32> to vector<16x128xf32>
      %49 = arith.addf %45, %48 : vector<16x128xf32>
      %cst_19 = arith.constant 0.000000e+00 : f32
      %50 = vector.broadcast %cst_19 : f32 to vector<16x128xf32>
      %51 = arith.maximumf %49, %50 : vector<16x128xf32>
      %52 = arith.truncf %51 : vector<16x128xf32> to vector<16x128xbf16>
      %c0_20 = arith.constant 0 : index
      %c0_21 = arith.constant 0 : index
      %53 = vector.load %arg6[%c0_20, %c0_21] : memref<16x128xbf16, #tpu.memory_space<vmem>>, vector<16x128xbf16>
      tpu.vector_store %arg6[%c0_20, %c0_21], %52 {strides = array<i32>} : memref<16x128xbf16, #tpu.memory_space<vmem>>, vector<16x128xbf16>,
    } else {
    }
    %c2_i32_6 = arith.constant 2 : i32
    %10 = arith.cmpi eq, %arg0, %c2_i32_6 : i32
    %11 = arith.extui %10 : i1 to i32
    %c0_i32_7 = arith.constant 0 : i32
    %12 = arith.cmpi ne, %11, %c0_i32_7 : i32
    scf.if %12 {
      %c0_8 = arith.constant 0 : index
      %c0_9 = arith.constant 0 : index
      %c0_10 = arith.constant 0 : index
      %13 = vector.load %arg4[%c0_8, %c0_9, %c0_10] : memref<1x3x128xf32, #tpu.memory_space<vmem>>, vector<1x1x128xf32>
      %14 = vector.shape_cast %13 : vector<1x1x128xf32> to vector<1x128xf32>
      %15 = vector.broadcast %14 : vector<1x128xf32> to vector<16x128xf32>
      %16 = arith.addf %6, %15 : vector<16x128xf32>
      %c0_11 = arith.constant 0 : index
      %c0_12 = arith.constant 0 : index
      %17 = vector.load %arg5[%c0_11, %c0_12] : memref<16x128xf32, #tpu.memory_space<vmem>>, vector<16x128xf32>
      tpu.vector_store %arg5[%c0_11, %c0_12], %16 {strides = array<i32>} : memref<16x128xf32, #tpu.memory_space<vmem>>, vector<16x128xf32>,
    } else {
    }
    return
  }
  func.func @transform_1(%arg0: i32, %arg1: memref<1xi32, #tpu.memory_space<smem>>) -> (i32, i32, i32) {
    %c0_i32 = arith.constant 0 : i32
    %c0_i32_0 = arith.constant 0 : i32
    %c0_i32_1 = arith.constant 0 : i32
    return %arg0, %c0_i32, %c0_i32_0 : i32, i32, i32
  }
  func.func @transform_2(%arg0: i32, %arg1: memref<1xi32, #tpu.memory_space<smem>>) -> (i32, i32, i32) {
    %c0_i32 = arith.constant 0 : i32
    %c0_i32_0 = arith.constant 0 : i32
    %c0_i32_1 = arith.constant 0 : i32
    return %arg0, %c0_i32, %c0_i32_0 : i32, i32, i32
  }
  func.func @transform_3(%arg0: i32, %arg1: memref<1xi32, #tpu.memory_space<smem>>) -> (i32, i32) {
    %c0_i32 = arith.constant 0 : i32
    %c0_i32_0 = arith.constant 0 : i32
    %c0_i32_1 = arith.constant 0 : i32
    return %c0_i32, %c0_i32_0 : i32, i32
  }
}

</mosaic_0001>

<llo_original>
// kernel: tpu_custom_call.1
$region0: #{tpu_custom_call.1}
  #allocation0 [shape = 'u32[]', space=smem, size = 0x4, offset = 0x4, fixed_abs, tag = 'smem constant byte address 0x4 - core index']
  #allocation1 [shape = 'u32[144,128]{1,0:T(1,128)}', space=vmem, size = 0x12000, scoped, tag = 'internal scratch']
  #allocation2 [shape = 'bf16[16,128]{1,0:T(8,128)(2,1)}', space=vmem, size = 0x1000, scoped, tag = 'scratch operand']
  #allocation3 [shape = 's32[1]{0}', space=sflag, size = 0x4, scoped, tag = 'scoped memory for tpu_custom_call.1']
  #allocation4 [shape = 's32[1]{0:T(128)S(6)}', space=smem, size = 0x200, scoped, tag = 'prefetched SMEM operand 0']
  #allocation12 [shape = 's32[]', space=sflag, size = 0x4, offset = 0, fixed_abs, tag = 'sflag constant byte address 0x0 - dummy sync flag']
  #allocation13 [shape = 's32[]', space=sflag, size = 0x4, offset = 0, fixed_abs, tag = 'sflag constant byte address 0x0 - dummy sync flag']
  #allocation14 [shape = 'u32[]', space=smem, size = 0x4, offset = 0x44, fixed_abs, tag = 'smem constant byte address 0x44 - assertion arg 0']
  #allocation15 [shape = 'u32[]', space=smem, size = 0x4, offset = 0x48, fixed_abs, tag = 'smem constant byte address 0x48 - assertion arg 1']
  %s0 = inlined_call_operand.<no memory space> [shape: s32[1], index: 0, kind: input, shape index: {}]
  %s1 = inlined_call_operand.hbm [shape: bf16[16,128], index: 1, kind: input, shape index: {}]
  %s2 = inlined_call_operand.hbm [shape: bf16[3,128,128], index: 2, kind: input, shape index: {}]
  %s3 = inlined_call_operand.hbm [shape: f32[3,3,128], index: 3, kind: input, shape index: {}]
  %s4 = inlined_call_operand.hbm [shape: f32[16,128], index: 4, kind: output, shape index: {}]
  %s5 = sld [smem:[#allocation0]]
  $region66: #{tpu_custom_call.1} parent=0
    _
  %s7 = ssub.s32 1, %s5
  %s8 = scalar_select 0, %s7, %s5
  %9 = sst [smem:[#allocation4]] %s0
  $region1: #{tpu_custom_call.1} parent=0
    #allocation5 [shape = 'u8[65536]{0}', space=vmem, size = 0x10000, scoped, tag = 'input window, operand 2']
    #allocation6 [shape = 's32[2]{0}', space=sflag, size = 0x8, scoped, tag = 'scoped memory for tpu_custom_call.1']
    #allocation7 [shape = 's32[2]{0}', space=sflag, size = 0x8, scoped, tag = 'scoped memory for tpu_custom_call.1']
    #allocation8 [shape = 'u8[4096]{0}', space=vmem, size = 0x1000, scoped, tag = 'input window, operand 3']
    #allocation9 [shape = 's32[2]{0}', space=sflag, size = 0x8, scoped, tag = 'scoped memory for tpu_custom_call.1']
    #allocation10 [shape = 'u8[8192]{0}', space=vmem, size = 0x2000, scoped, tag = 'output window, operand 0, single buffered']
    %10 = vsyncpa [#allocation6], 0
    %s11 = scalar_lea.sflag [#allocation6], 1
    %12 = vsyncpa %s11, 0
    %13 = vsyncpa [#allocation9], 0
    %s14 = scalar_lea.sflag [#allocation9], 1
    %15 = vsyncpa %s14, 0
    %16 = vsyncpa [#allocation7], 0
    loop: start=0, step=1, limit=5
    $region2: #{tpu_custom_call.1} parent=1 // loop_pre_header
      _
    $region3: #{tpu_custom_call.1} parent=1 // loop_header
      %s18 = sphi 0, %s22
      %p19 = scmp.ge.s32.totalorder %s18, 5
      %s28 = sphi 0, %s30
      %s31 = sphi 0, %s28
      %s32 = sphi 0, %s31
      %s48 = sphi 0, %s32
      %s54 = sphi 0, %s56
      %s57 = sphi 0, %s54
      %s58 = sphi 0, %s57
      %s74 = sphi 0, %s58
      %s78 = sphi 0, %s78
      %s80 = sphi 0, %s78
      %s81 = sphi 0, %s80
      %s95 = sphi 0, %s81
    $region4: #{tpu_custom_call.1} parent=1 // loop_header_branch
      %21 = sbr.rel (%p19) target = $region8
    $region5: #{tpu_custom_call.1} parent=1 // loop_body
      %s23 = ssub.s32 %s18, 1
      %s24 = ssub.s32 %s18, 2
      %s25 = sadd.s32 %s18, 1
      %s26 = ssub.s32 %s18, %s25
      %p27 = scmp.eq.s32.totalorder %s26, 0
      %s29 = sadd.s32 %s28, 1
      %s30 = scalar_select %p27, %s28, %s29
      %p33 = pneg %p27
      %p34 = scmp.eq.s32.totalorder %s18, 2
      %p35 = por %p33, %p34
      %p36 = scmp.ne.s32.totalorder %s28, %s31
      %p37 = scmp.eq.s32.totalorder %s18, 0
      %p38 = por %p36, %p37
      %p39 = scmp.ne.s32.totalorder %s28, %s31
      %p40 = scmp.eq.s32.totalorder %s23, 2
      %p41 = por %p39, %p40
      %p42 = scmp.ne.s32.totalorder %s31, %s32
      %p43 = scmp.eq.s32.totalorder %s23, 0
      %p44 = por %p42, %p43
      %p45 = scmp.ne.s32.totalorder %s31, %s32
      %p46 = scmp.eq.s32.totalorder %s24, 2
      %p47 = por %p45, %p46
      %p49 = scmp.ne.s32.totalorder %s32, %s48
      %p50 = scmp.eq.s32.totalorder %s24, 0
      %p51 = por %p49, %p50
      %s52 = ssub.s32 %s18, %s25
      %p53 = scmp.eq.s32.totalorder %s52, 0
      %s55 = sadd.s32 %s54, 1
      %s56 = scalar_select %p53, %s54, %s55
      %p59 = pneg %p53
      %p60 = scmp.eq.s32.totalorder %s18, 2
      %p61 = por %p59, %p60
      %p62 = scmp.ne.s32.totalorder %s54, %s57
      %p63 = scmp.eq.s32.totalorder %s18, 0
      %p64 = por %p62, %p63
      %p65 = scmp.ne.s32.totalorder %s54, %s57
      %p66 = scmp.eq.s32.totalorder %s23, 2
      %p67 = por %p65, %p66
      %p68 = scmp.ne.s32.totalorder %s57, %s58
      %p69 = scmp.eq.s32.totalorder %s23, 0
      %p70 = por %p68, %p69
      %p71 = scmp.ne.s32.totalorder %s57, %s58
      %p72 = scmp.eq.s32.totalorder %s24, 2
      %p73 = por %p71, %p72
      %p75 = scmp.ne.s32.totalorder %s58, %s74
      %p76 = scmp.eq.s32.totalorder %s24, 0
      %p77 = por %p75, %p76
      %s79 = sadd.s32 %s78, 1
      %p82 = scmp.eq.s32.totalorder %s18, 2
      %p83 = scmp.ne.s32.totalorder %s78, %s80
      %p84 = scmp.eq.s32.totalorder %s18, 0
      %p85 = por %p83, %p84
      %p86 = scmp.ne.s32.totalorder %s78, %s80
      %p87 = scmp.eq.s32.totalorder %s23, 2
      %p88 = por %p86, %p87
      %p89 = scmp.ne.s32.totalorder %s80, %s81
      %p90 = scmp.eq.s32.totalorder %s23, 0
      %p91 = por %p89, %p90
      %p92 = scmp.ne.s32.totalorder %s80, %s81
      %p93 = scmp.eq.s32.totalorder %s24, 2
      %p94 = por %p92, %p93
      %p96 = scmp.ne.s32.totalorder %s81, %s95
      %p97 = scmp.eq.s32.totalorder %s24, 0
      %p98 = por %p96, %p97
      %p99 = scmp.le.s32.totalorder 1, %s18
      %p100 = scmp.lt.s32.totalorder %s18, 4
      %p101 = pnand %p99, %p100
      %p102 = pneg %p101
      // Predicated region
      $region9: #{tpu_custom_call.1} parent=5 // pred_check
        _
      $region10: #{tpu_custom_call.1} parent=5 // pred_check_branch
        %104 = sbr.rel (%p101) target = $region12
      $region11: #{tpu_custom_call.1} parent=5 // pred_region
        %s105 = ssub.s32 %s18, 1
      $region12: #{tpu_custom_call.1} parent=5 // pred_fallthru
        _
      %p106 = scmp.lt.s32.totalorder %s18, 3
      // Predicated region
      $region13: #{tpu_custom_call.1} parent=5 // pred_check
        %p107 = pneg %p106
      $region14: #{tpu_custom_call.1} parent=5 // pred_check_branch
        %109 = sbr.rel (%p107) target = $region16
      $region15: #{tpu_custom_call.1} parent=5 // pred_region
        // Predicated region
        $region17: #{tpu_custom_call.1} parent=15 // pred_check
          %p110 = pneg %p38
        $region18: #{tpu_custom_call.1} parent=15 // pred_check_branch
          %112 = sbr.rel (%p110) target = $region20
        $region19: #{tpu_custom_call.1} parent=15 // pred_region
          %s113 = sand.u32 %s28, 1
          %s114 = scalar_lea.sflag [#allocation6], %s113
          %s115 = sand.u32 %s28, 1
          %s116 = smul.addr %s115, 64
          %s117 = scalar_lea.vmem [#allocation5], %s116
          %s119 = ssub.s32 1024, 1024
          %120 = vsyncadd %s114, %s119
          %s121 = smul.addr %s18, 16
          %s122 = smul.addr %s121, 64
          %s123 = scalar_lea.hbm %s2, %s122
          %s124 = sshll.u32 %s117, 4
          %s125 = int_to_ptr.vmem [resolvable:$true] %s124
          %130 = dma.hbm_to_vmem [thread:$0]  %s123, 1024, %s125, %s114, 64, 64, 4
        $region20: #{tpu_custom_call.1} parent=15 // pred_fallthru
          _
        // Predicated region
        $region21: #{tpu_custom_call.1} parent=15 // pred_check
          %p131 = pneg %p64
        $region22: #{tpu_custom_call.1} parent=15 // pred_check_branch
          %133 = sbr.rel (%p131) target = $region24
        $region23: #{tpu_custom_call.1} parent=15 // pred_region
          %s134 = sand.u32 %s54, 1
          %s135 = scalar_lea.sflag [#allocation9], %s134
          %s136 = sand.u32 %s54, 1
          %s137 = smul.addr %s136, 4
          %s138 = scalar_lea.vmem [#allocation8], %s137
          %s140 = ssub.s32 64, 64
          %141 = vsyncadd %s135, %s140
          %s142 = smul.addr %s18, 64
          %s143 = scalar_lea.hbm %s3, %s142
          %s145 = sshll.u32 %s138, 4
          %s146 = int_to_ptr.vmem [resolvable:$true] %s145
          %148 = dma.hbm_to_vmem [thread:$0]  %s143, 64, %s146, %s135
        $region24: #{tpu_custom_call.1} parent=15 // pred_fallthru
          _
      $region16: #{tpu_custom_call.1} parent=5 // pred_fallthru
        _
      %p149 = scmp.le.s32.totalorder 1, %s18
      %p150 = scmp.lt.s32.totalorder %s18, 4
      %p151 = pnand %p149, %p150
      %p152 = pneg %p151
      // Predicated region
      $region25: #{tpu_custom_call.1} parent=5 // pred_check
        _
      $region26: #{tpu_custom_call.1} parent=5 // pred_check_branch
        %154 = sbr.rel (%p151) target = $region28
      $region27: #{tpu_custom_call.1} parent=5 // pred_region
        %s155 = ssub.s32 %s18, 1
        %s156 = sand.u32 %s31, 1
        %s157 = scalar_lea.sflag [#allocation6], %s156
        %s158 = sand.u32 %s31, 1
        %s159 = smul.addr %s158, 64
        %s160 = scalar_lea.vmem [#allocation5], %s159
        // Predicated region
        $region29: #{tpu_custom_call.1} parent=27 // pred_check
          %p161 = pneg %p44
        $region30: #{tpu_custom_call.1} parent=27 // pred_check_branch
          %163 = sbr.rel (%p161) target = $region32
        $region31: #{tpu_custom_call.1} parent=27 // pred_region
          %164 = dma.done %s157, 1024
        $region32: #{tpu_custom_call.1} parent=27 // pred_fallthru
          _
        %s165 = sand.u32 %s57, 1
        %s166 = scalar_lea.sflag [#allocation9], %s165
        %s167 = sand.u32 %s57, 1
        %s168 = smul.addr %s167, 4
        %s169 = scalar_lea.vmem [#allocation8], %s168
        // Predicated region
        $region33: #{tpu_custom_call.1} parent=27 // pred_check
          %p170 = pneg %p70
        $region34: #{tpu_custom_call.1} parent=27 // pred_check_branch
          %172 = sbr.rel (%p170) target = $region36
        $region35: #{tpu_custom_call.1} parent=27 // pred_region
          %173 = dma.done %s166, 64
        $region36: #{tpu_custom_call.1} parent=27 // pred_fallthru
          _
        %s174 = sand.u32 %s31, 1
        %s175 = scalar_lea.sflag [#allocation6], %s174
        %s176 = sand.u32 %s31, 1
        %s177 = smul.addr %s176, 64
        %s178 = scalar_lea.vmem [#allocation5], %s177
        %p179 = pneg %p44
        %p180 = pneg %p41
        %s181 = sand.u32 %s57, 1
        %s182 = scalar_lea.sflag [#allocation9], %s181
        %s183 = sand.u32 %s57, 1
        %s184 = smul.addr %s183, 4
        %s185 = scalar_lea.vmem [#allocation8], %s184
        %p186 = pneg %p70
        %p187 = pneg %p67
        %p188 = pneg %p91
        %p189 = pneg %p88
        %p191 = scmp.eq.s32.totalorder %s23, 0
        // Predicated region
        $region37: #{tpu_custom_call.1} parent=27 // pred_check
          %p192 = pneg %p191
        $region38: #{tpu_custom_call.1} parent=27 // pred_check_branch
          %194 = sbr.rel (%p192) target = $region40
        $region39: #{tpu_custom_call.1} parent=27 // pred_region
          $region41: #{tpu_custom_call.1} parent=39
            #allocation11 [shape = 's32[1]{0}', space=sflag, size = 0x4, scoped, tag = 'scoped memory for tpu_custom_call.1']
            // Predicated region
            $region42: #{tpu_custom_call.1} parent=41 // pred_check
              _
            $region43: #{tpu_custom_call.1} parent=41 // pred_check_branch
              %196 = sbr.rel target = $region45
            $region44: #{tpu_custom_call.1} parent=41 // pred_region
              %197 = sst [smem:[#allocation14]] [#allocation13]
              %198 = sst [smem:[#allocation15]] [#allocation12]
            $region45: #{tpu_custom_call.1} parent=41 // pred_fallthru
              _
            %200 = shalt.err (0)
            %s202 = sshll.u32 [#allocation2], 4
            %s203 = int_to_ptr.vmem [resolvable:$true] %s202
            %205 = dma.hbm_to_vmem [thread:$0]  %s1, 128, %s203, [#allocation11]
            %s206 = smul.u32 4, 2
            %s207 = smul.u32 %s206, 1
            %s208 = sshll.u32 %s207, 4
            %209 = dma.done [#allocation11], %s208
        $region40: #{tpu_custom_call.1} parent=27 // pred_fallthru
          _
        %v210 = vld [vmem:[#allocation2] sm:$0xf]
        %v211 = vld [vmem:[#allocation2 + $0x4] sm:$0xf]
        %v212 = vld [vmem:[%s160] sm:$0xf]
        %v213 = vld [vmem:[%s160 + $0x4] sm:$0xf]
        %v214 = vld [vmem:[%s160 + $0x8] sm:$0xf]
        %v215 = vld [vmem:[%s160 + $0xc] sm:$0xf]
        %v216 = vld [vmem:[%s160 + $0x10] sm:$0xf]
        %v217 = vld [vmem:[%s160 + $0x14] sm:$0xf]
        %v218 = vld [vmem:[%s160 + $0x18] sm:$0xf]
        %v219 = vld [vmem:[%s160 + $0x1c] sm:$0xf]
        %v220 = vld [vmem:[%s160 + $0x20] sm:$0xf]
        %v221 = vld [vmem:[%s160 + $0x24] sm:$0xf]
        %v222 = vld [vmem:[%s160 + $0x28] sm:$0xf]
        %v223 = vld [vmem:[%s160 + $0x2c] sm:$0xf]
        %v224 = vld [vmem:[%s160 + $0x30] sm:$0xf]
        %v225 = vld [vmem:[%s160 + $0x34] sm:$0xf]
        %v226 = vld [vmem:[%s160 + $0x38] sm:$0xf]
        %v227 = vld [vmem:[%s160 + $0x3c] sm:$0xf]
        %v230 = vunpack.c.l.b16 %v210
        %v231 = vunpack.c.l.b16 %v211
        %v232 = vpack.c.b16 %v231, %v230
        %v250 = vunpack.c.l.b16 %v212
        %v251 = vunpack.c.l.b16 %v213
        %v252 = vunpack.c.l.b16 %v214
        %v253 = vunpack.c.l.b16 %v215
        %v254 = vunpack.c.l.b16 %v216
        %v255 = vunpack.c.l.b16 %v217
        %v256 = vunpack.c.l.b16 %v218
        %v257 = vunpack.c.l.b16 %v219
        %v258 = vunpack.c.l.b16 %v220
        %v259 = vunpack.c.l.b16 %v221
        %v260 = vunpack.c.l.b16 %v222
        %v261 = vunpack.c.l.b16 %v223
        %v262 = vunpack.c.l.b16 %v224
        %v263 = vunpack.c.l.b16 %v225
        %v264 = vunpack.c.l.b16 %v226
        %v265 = vunpack.c.l.b16 %v227
        %v266 = vpack.c.b16 %v251, %v250
        %v267 = vpack.c.b16 %v253, %v252
        %v268 = vpack.c.b16 %v255, %v254
        %v269 = vpack.c.b16 %v257, %v256
        %v270 = vpack.c.b16 %v259, %v258
        %v271 = vpack.c.b16 %v261, %v260
        %v272 = vpack.c.b16 %v263, %v262
        %v273 = vpack.c.b16 %v265, %v264
        %282 = vmatprep.subr.bf16.mxu0 0
        %283 = vmatpush1.bf16.msra.mxu0 %v273
        %284 = vmatprep.subr.bf16.mxu0 0
        %285 = vmatpush1.bf16.msra.mxu0 %v272
        %286 = vmatprep.subr.bf16.mxu0 0
        %287 = vmatpush1.bf16.msra.mxu0 %v271
        %288 = vmatprep.subr.bf16.mxu0 0
        %289 = vmatpush1.bf16.msra.mxu0 %v270
        %290 = vmatprep.subr.bf16.mxu0 0
        %291 = vmatpush1.bf16.msra.mxu0 %v269
        %292 = vmatprep.subr.bf16.mxu0 0
        %293 = vmatpush1.bf16.msra.mxu0 %v268
        %294 = vmatprep.subr.bf16.mxu0 0
        %295 = vmatpush1.bf16.msra.mxu0 %v267
        %296 = vmatprep.subr.bf16.mxu0 0
        %297 = vmatpush1.bf16.msra.mxu0 %v266
        %298 = vmatprep.subr.bf16.mxu0 0
        %299 = vmatpush2.bf16.msra.mxu0 0
        %300 = vmatprep.subr.bf16.mxu0 0
        %301 = vmatpush2.bf16.msra.mxu0 0
        %302 = vmatprep.subr.bf16.mxu0 0
        %303 = vmatpush2.bf16.msra.mxu0 0
        %304 = vmatprep.subr.bf16.mxu0 0
        %305 = vmatpush2.bf16.msra.mxu0 0
        %306 = vmatprep.subr.bf16.mxu0 0
        %307 = vmatpush2.bf16.msra.mxu0 0
        %308 = vmatprep.subr.bf16.mxu0 0
        %309 = vmatpush2.bf16.msra.mxu0 0
        %310 = vmatprep.subr.bf16.mxu0 0
        %311 = vmatpush2.bf16.msra.mxu0 0
        %312 = vmatprep.subr.bf16.mxu0 0
        %313 = vmatpush2.bf16.msra.mxu0 0
        %314 = vmatprep.mubr.bf16.mxu0 0
        %315 = vmatmul.mubr.bf16.gmra.mxu0 %v232
        %v316 = vpop.f32.mrf.mxu0
        %v317 = vadd.f32 0.0, %v316
        %v318 = vpop.f32.mrf.mxu0
        %v319 = vpop.f32.mrf.mxu0
        %v320 = vadd.f32 0.0, %v319
        %v321 = vpop.f32.mrf.mxu0
        %322 = vdwg.mxu0
        %p323 = scmp.lt.s32.totalorder %s23, 2
        // Predicated region
        $region46: #{tpu_custom_call.1} parent=27 // pred_check
          %p324 = pneg %p323
        $region47: #{tpu_custom_call.1} parent=27 // pred_check_branch
          %326 = sbr.rel (%p324) target = $region49
        $region48: #{tpu_custom_call.1} parent=27 // pred_region
          %s327 = sld [smem:[#allocation4]]
          %v328 = vlaneseq
          %v329 = vshrl.u32 %v328, 7
          %v330 = vadd.s32 %v329, 8
          %v331 = vstv %s327
          %vm332 = vcmp.lt.s32.totalorder %v329, %v331
          %vm333 = vcmp.lt.s32.totalorder %v330, %v331
          %s334 = scvt.s32.f32 %s327
          %v335 = vstv %s334
          %v336 = vrcp.pop %v335
          %s337 = vtos %v336
          %v338 = vsel %vm332, 1, 0
          %v339 = vsel %vm333, 1, 0
          %vm340 = vcmp.eq.s32.totalorder %v338, 1
          %vm341 = vcmp.eq.s32.totalorder %v339, 1
          %v342 = vsel %vm340, %v317, 0.0
          %v343 = vsel %vm341, %v320, 0.0
          %v344 = vadd.f32 %v342, %v343
          %v345 = vrot.slane %v344, 4
          %v346 = vadd.f32 %v344, %v345
          %v347 = vrot.slane %v346, 2
          %v348 = vadd.f32 %v346, %v347
          %v349 = vrot.slane %v348, 1
          %v350 = vadd.f32 %v348, %v349
          %v351 = vstv %s337
          %v352 = vmul.f32 %v350, %v351
          %v353 = vsub.f32 %v317, %v352
          %v354 = vsub.f32 %v320, %v352
          %v355 = vsel %vm340, %v353, 0.0
          %v356 = vsel %vm341, %v354, 0.0
          %v357 = vmul.f32 %v355, %v355
          %v358 = vmul.f32 %v356, %v356
          %v359 = vadd.f32 %v357, %v358
          %v360 = vrot.slane %v359, 4
          %v361 = vadd.f32 %v359, %v360
          %v362 = vrot.slane %v361, 2
          %v363 = vadd.f32 %v361, %v362
          %v364 = vrot.slane %v363, 1
          %v365 = vadd.f32 %v363, %v364
          %v366 = vmul.f32 %v365, %v351
          %v367 = vld [vmem:[%s169 + $0x1] sm:$0x1]
          %v368 = vadd.f32 %v366, 1e-05
          %v369 = vrsqrt.pop %v368
          %v370 = vmul.f32 %v367, %v369
          %v371 = vlaneseq
          %v372 = vshrl.u32 %v371, 7
          %v373 = vsub.s32 0, %v372
          %v374 = vrot.slane %v370, %v373
          %v375 = vmul.f32 %v355, %v374
          %v376 = vmul.f32 %v356, %v374
          %v377 = vld [vmem:[%s169 + $0x2] sm:$0x1]
          %v378 = vlaneseq
          %v379 = vshrl.u32 %v378, 7
          %v380 = vsub.s32 0, %v379
          %v381 = vrot.slane %v377, %v380
          %v382 = vadd.f32 %v375, %v381
          %v383 = vadd.f32 %v376, %v381
          %v384 = vmax.f32 %v382, 0.0
          %v385 = vmax.f32 %v383, 0.0
          %v386 = vpack.c.bf16 %v385, %v384
          %v388 = vunpack.c.l.b16 %v386
          %v389 = vunpack.c.h.b16 %v386
          %v390 = vpack.c.b16 %v388, %v388
          %v391 = vpack.c.b16 %v389, %v389
          %394 = vst [vmem:[#allocation2] sm:$0xf] %v390
          %395 = vst [vmem:[#allocation2 + $0x4] sm:$0xf] %v391
        $region49: #{tpu_custom_call.1} parent=27 // pred_fallthru
          _
        %p396 = scmp.eq.s32.totalorder %s23, 2
        // Predicated region
        $region50: #{tpu_custom_call.1} parent=27 // pred_check
          %p397 = pneg %p396
        $region51: #{tpu_custom_call.1} parent=27 // pred_check_branch
          %399 = sbr.rel (%p397) target = $region53
        $region52: #{tpu_custom_call.1} parent=27 // pred_region
          %v400 = vld [vmem:[%s169] sm:$0x1]
          %v401 = vlaneseq
          %v402 = vshrl.u32 %v401, 7
          %v403 = vsub.s32 0, %v402
          %v404 = vrot.slane %v400, %v403
          %v405 = vadd.f32 %v317, %v404
          %v406 = vadd.f32 %v320, %v404
          %407 = vst [vmem:[#allocation10] sm:$0xff] %v405
          %408 = vst [vmem:[#allocation10 + $0x8] sm:$0xff] %v406
        $region53: #{tpu_custom_call.1} parent=27 // pred_fallthru
          _
        // Predicated region
        $region54: #{tpu_custom_call.1} parent=27 // pred_check
          %p409 = pneg %p88
        $region55: #{tpu_custom_call.1} parent=27 // pred_check_branch
          %411 = sbr.rel (%p409) target = $region57
        $region56: #{tpu_custom_call.1} parent=27 // pred_region
          %s413 = ssub.s32 256, 256
          %414 = vsyncadd [#allocation7], %s413
          %s415 = sshll.u32 [#allocation10], 4
          %s416 = int_to_ptr.vmem [resolvable:$true] %s415
          %421 = dma.vmem_to_hbm [thread:$0]  %s416, 256, %s4, [#allocation7], 128, 128, 8
        $region57: #{tpu_custom_call.1} parent=27 // pred_fallthru
          _
        // Predicated region
        $region58: #{tpu_custom_call.1} parent=27 // pred_check
          %p422 = pneg %p88
        $region59: #{tpu_custom_call.1} parent=27 // pred_check_branch
          %424 = sbr.rel (%p422) target = $region61
        $region60: #{tpu_custom_call.1} parent=27 // pred_region
          %425 = dma.done [#allocation7], 256
        $region61: #{tpu_custom_call.1} parent=27 // pred_fallthru
          _
      $region28: #{tpu_custom_call.1} parent=5 // pred_fallthru
        _
      %p426 = scmp.le.s32.totalorder 2, %s18
      // Predicated region
      $region62: #{tpu_custom_call.1} parent=5 // pred_check
        %p427 = pneg %p426
      $region63: #{tpu_custom_call.1} parent=5 // pred_check_branch
        %429 = sbr.rel (%p427) target = $region65
      $region64: #{tpu_custom_call.1} parent=5 // pred_region
        %s430 = ssub.s32 %s18, 2
      $region65: #{tpu_custom_call.1} parent=5 // pred_fallthru
        _
    $region6: #{tpu_custom_call.1} parent=1 // loop_footer
      %s22 = sadd.s32 1, %s18
    $region7: #{tpu_custom_call.1} parent=1 // loop_footer_branch
      %17 = sbr.rel target = $region3
    $region8: #{tpu_custom_call.1} parent=1 // loop_exit
      _
    %431 = vsyncpa [#allocation6], 1
    %s432 = scalar_lea.sflag [#allocation6], 1
    %433 = vsyncpa %s432, 1
    %434 = vsyncpa [#allocation9], 1
    %s435 = scalar_lea.sflag [#allocation9], 1
    %436 = vsyncpa %s435, 1
    %437 = vsyncpa [#allocation7], 1
    %s438 = scalar_lea.sflag [#allocation7], 1
    %439 = vsyncpa %s438, 1

</llo_original>
